<compile_context>
chip_gen: v7x
topology: tpu7x:2x2x1
jax: 0.10.0
libtpu: 0.0.40
codegen_flags: <defaults>
</compile_context>

<pallas_src>
import numpy as np
import jax
import jax.numpy as jnp
from jax import lax
from jax.experimental import pallas as pl
from jax.experimental.pallas import tpu as pltpu


# ----------------------------------------------------------------------------
# __init__ helpers (bases are unused in forward, kept for fidelity)
# ----------------------------------------------------------------------------
def _orth(v):
    x, y, z = v
    o = np.array([0.0, -z, y]) if abs(x) < abs(y) else np.array([-z, 0.0, x])
    return o / np.linalg.norm(o)


def gold_spiral_sampling_patch(v, alpha, num_pts):
    v = np.asarray(v, dtype=np.float64)
    v1 = _orth(v)
    v2 = np.cross(v, v1)
    indices = np.arange(num_pts) + 0.5
    phi = np.arccos(1.0 - (1.0 - np.cos(alpha)) * indices / num_pts)
    theta = np.pi * (1.0 + 5.0 ** 0.5) * indices
    r = np.sin(phi)
    pts = (v * np.cos(phi)[:, None]
           + r[:, None] * (v1 * np.cos(theta)[:, None] + v2 * np.sin(theta)[:, None]))
    return pts.astype(np.float32)


# ----------------------------------------------------------------------------
# Pallas kernel: greedy angular NMS over confidence-sorted directions.
#   Bc batch rows per grid step; Q real queries; Qp = Q padded to >=128 lanes.
# ----------------------------------------------------------------------------
def _make_select_kernel(Bc, Q, Qp):
    NO_CAND = Qp  # sentinel lane index meaning "no remaining candidate"

    def kernel(num_ref, cth_ref, posf_ref, pos_ref, mask_ref,
               rmax_ref, mrow_ref, sel_ref):
        # num_ref : SMEM (Bp,)        i32   #GT vanishing points per image
        # cth_ref : SMEM (Bp,)        f32   cos(pi / (num + 1))
        # posf_ref: SMEM (Bp*3*Qp,)   f32   flattened positions (scalar reads)
        # pos_ref : VMEM (Bc, 3, Qp)  f32   lane-dense sorted unit directions
        # mask_ref: VMEM (Bc, Qp)     i32   output selection mask
        # rmax_ref: VMEM (1, Qp)      f32   running max |p_sel . p_j|
        # mrow_ref: VMEM (1, Qp)      i32   mask row accumulator
        # sel_ref : SMEM (Qp,)        i32   accepted (sorted) query indices
        g = pl.program_id(0)
        col_ids = lax.broadcasted_iota(jnp.int32, (1, Qp), 1)
        valid_q = col_ids < Q                                # static lane-pad mask

        def do_row(r, carry):
            b = g * Bc + r                                   # global (padded) batch row
            num = num_ref[b]
            cos_th = cth_ref[b]
            base = b * (3 * Qp)

            prow = pos_ref[r]                                # (3, Qp)
            px = prow[0:1, :]                                # (1, Qp) lane-dense comps
            py = prow[1:2, :]
            pz = prow[2:3, :]

            # ---- query 0 (highest confidence) is always selected -------------
            x0 = posf_ref[base + 0]
            y0 = posf_ref[base + Qp]
            z0 = posf_ref[base + 2 * Qp]
            rmax0 = jnp.abs(px * x0 + py * y0 + pz * z0)     # (1, Qp) pure VPU
            rmax0 = jnp.where(valid_q, rmax0, jnp.float32(2.0))  # block padded lanes
            rmax_ref[...] = rmax0
            sel_ref[0] = jnp.int32(0)

            avail0 = jnp.logical_and(rmax0 <= cos_th, col_ids > 0)
            next0 = jnp.min(jnp.where(avail0, col_ids, NO_CAND))

            # ---- jump loop: every iteration is an accept ----------------------
            def cond(state):
                cnt, i = state
                return jnp.logical_and(cnt < num, i < NO_CAND)

            def body(state):
                cnt, i = state
                sel_ref[cnt] = i                             # scalar slot, off vector path
                xi = posf_ref[base + i]
                yi = posf_ref[base + Qp + i]
                zi = posf_ref[base + 2 * Qp + i]
                dots = jnp.abs(px * xi + py * yi + pz * zi)  # (1, Qp) VPU only
                new_rmax = jnp.maximum(rmax_ref[...], dots)
                rmax_ref[...] = new_rmax
                avail = jnp.logical_and(new_rmax <= cos_th, col_ids > i)
                nxt = jnp.min(jnp.where(avail, col_ids, NO_CAND))
                return cnt + jnp.int32(1), nxt

            cnt_final, _ = lax.while_loop(cond, body, (jnp.int32(1), next0))

            # ---- build the lane-dense mask row once, after the loop ----------
            mrow_ref[...] = jnp.zeros_like(mrow_ref)

            def build(t, c):
                s = sel_ref[t]
                mrow_ref[...] = jnp.where(col_ids == s, jnp.int32(1), mrow_ref[...])
                return c

            lax.fori_loop(0, cnt_final, build, 0)
            mask_ref[pl.ds(r, 1), :] = mrow_ref[...]         # unmasked >=128-lane store
            return carry

        lax.fori_loop(0, Bc, do_row, 0, unroll=(Bc <= 8))

    return kernel


def _greedy_select_masks(pos_sorted, nums, cos_th):
    """pos_sorted: (B, Q, 3) f32, nums: (B,) i32, cos_th: (B,) f32 -> (B, Q) i32."""
    B, Q, _ = pos_sorted.shape
    Qp = max(128, ((Q + 127) // 128) * 128)        # lane-dense, unmasked stores
    G = 2 if B >= 2 else 1                         # 2 steps: keeps v7x megacore fed,
    Bc = -(-B // G)                                #   only 1 extra step on v5e/v6e
    Bp = G * Bc

    # Layout plumbing only: lane-dense (3, Qp) per row + flat SMEM copy for
    # per-accept scalar reads.  (For very large B*Q the SMEM copy would need to
    # be blocked; fine at these shapes.)
    pos_t = jnp.transpose(pos_sorted, (0, 2, 1))                     # (B, 3, Q)
    pos_t = jnp.pad(pos_t, ((0, Bp - B), (0, 0), (0, Qp - Q)))       # (Bp, 3, Qp)
    pos_flat = pos_t.reshape(-1)                                     # (Bp*3*Qp,)
    nums_p = jnp.pad(nums, (0, Bp - B))                              # padded rows: num=0
    cth_p = jnp.pad(cos_th, (0, Bp - B))

    kernel = _make_select_kernel(Bc, Q, Qp)
    mask3 = pl.pallas_call(
        kernel,
        out_shape=jax.ShapeDtypeStruct((G, Bc, Qp), jnp.int32),
        grid=(G,),
        in_specs=[
            pl.BlockSpec(memory_space=pltpu.MemorySpace.SMEM),        # nums (Bp,)
            pl.BlockSpec(memory_space=pltpu.MemorySpace.SMEM),        # cos_th (Bp,)
            pl.BlockSpec(memory_space=pltpu.MemorySpace.SMEM),        # pos_flat
            pl.BlockSpec((Bc, 3, Qp), lambda g: (g, 0, 0)),           # lane-dense pos
        ],
        out_specs=pl.BlockSpec((None, Bc, Qp), lambda g: (g, 0, 0)),  # mask block
        scratch_shapes=[
            pltpu.VMEM((1, Qp), jnp.float32),                         # rmax
            pltpu.VMEM((1, Qp), jnp.int32),                           # mask row acc
            pltpu.SMEM((Qp,), jnp.int32),                             # accepted idx list
        ],
        compiler_params=pltpu.CompilerParams(
            dimension_semantics=("parallel",)),                       # megacore over G
    )(nums_p, cth_p, pos_flat, pos_t)
    return mask3.reshape(Bp, Qp)[:B, :Q]


# ----------------------------------------------------------------------------
# Module wrapper (mirrors the PyTorch PostProcess)
# ----------------------------------------------------------------------------
class PostProcess:
    def __init__(self, phase="val"):
        self.phase = phase
        self.bases = jnp.asarray(
            gold_spiral_sampling_patch(np.array([0.0, 0.0, 1.0]),
                                       alpha=90.0 * np.pi / 180.0, num_pts=256))
        self.yita = 0.157
        self._select = jax.jit(self._device_select)

    def _device_select(self, logits, pos, vps):
        # num valid GT VPs per image: columns with sum(|vpt|, dim=0) > 1e-5
        valid = jnp.sum(jnp.abs(vps), axis=1) > 1e-5
        nums = jnp.sum(valid.astype(jnp.int32), axis=1)                   # (B,)
        cos_th = jnp.cos(jnp.pi / (nums.astype(jnp.float32) + 1.0))       # (B,)
        # Sort queries by confidence (descending).  For very large Q (>=512) a
        # lax.top_k(k ~ few * max_num) prefilter would shrink the sort + kernel
        # tile, but it bounds the number of queries the NMS may visit, so the
        # exact argsort is kept here to preserve the reference semantics.
        order = jnp.argsort(-logits[..., 0], axis=1)                      # (B, Q)
        pos_sorted = jnp.take_along_axis(pos, order[..., None], axis=1)   # (B, Q, 3)
        mask = _greedy_select_masks(pos_sorted, nums, cos_th)             # (B, Q) i32
        return pos_sorted, mask, nums

    def __call__(self, outputs, target):
        logits = outputs["pred_logits"]            # (B, Q, 1)
        pos = outputs["pred_pos"]                  # (B, Q, 3)
        vps = target["vps_unique"]                 # (B, 3, M), zero-padded columns
        B = pos.shape[0]

        # TODO(synk): 'train' phase applies a data-dependent (p_conf > 0) filter with
        # a dynamic shape; only the default 'val' phase is implemented here.

        pos_sorted, mask, nums = self._select(logits, pos, vps)

        # Single blocking host transfer; ragged split done in numpy on the host.
        pos_np, mask_np, nums_np = jax.device_get((pos_sorted, mask, nums))
        outs = [pos_np[b][mask_np[b].astype(bool)] for b in range(B)]

        self._debug = (pos_np, nums_np, mask_np)
        return outs, target


# ----------------------------------------------------------------------------
# pure-numpy reference of the greedy selection (same math, for a sanity check)
# ----------------------------------------------------------------------------
def _reference_masks(pos_sorted, nums):
    B, Q, _ = pos_sorted.shape
    masks = []
    for b in range(B):
        P = pos_sorted[b]
        num = int(nums[b])
        cand = [0]
        for i in range(1, Q):
            if len(cand) == num:
                break
            dots = np.clip(np.abs(P[cand] @ P[i:i + 1].T), 0.0, 1.0)
            dst = float(np.min(np.arccos(dots)))
            if dst < np.pi / (num + 1):
                continue
            cand.append(i)
        m = np.zeros(Q, np.int32)
        m[cand] = 1
        masks.append(m)
    return np.stack(masks)


if __name__ == "__main__":
    B, Q, M = 2, 8, 4
    key = jax.random.PRNGKey(0)
    k1, k2, k3 = jax.random.split(key, 3)

    pred_logits = jax.random.normal(k1, (B, Q, 1), jnp.float32)
    pred_pos = jax.random.normal(k2, (B, Q, 3), jnp.float32)
    pred_pos = pred_pos / jnp.linalg.norm(pred_pos, axis=-1, keepdims=True)

    vps = jax.random.normal(k3, (B, 3, M), jnp.float32)
    vps = vps / jnp.linalg.norm(vps, axis=1, keepdims=True)
    valid_counts = jnp.array([3, 2], jnp.int32)                 # GT VPs per image
    col_mask = (jnp.arange(M)[None, :] < valid_counts[:, None]).astype(jnp.float32)
    vps = vps * col_mask[:, None, :]                            # zero-pad invalid cols

    post = PostProcess(phase="val")
    outs, tgt = post({"pred_logits": pred_logits, "pred_pos": pred_pos},
                     {"vps_unique": vps})
    jax.block_until_ready(outs)

    # correctness check against a straightforward numpy implementation
    pos_sorted_np, nums_np, mask_np = post._debug
    ref_mask = _reference_masks(pos_sorted_np, nums_np)
    assert np.array_equal(mask_np, ref_mask), (mask_np, ref_mask)
    for b in range(B):
        assert outs[b].shape[1] == 3 and outs[b].shape[0] == int(ref_mask[b].sum())

    print("KERNEL_OK")
</pallas_src>

<mosaic_0001>
module attributes {stable_mosaic.version = 11 : i64} {
  func.func @kernel(%arg0: i32, %arg1: memref<2xi32, #tpu.memory_space<smem>>, %arg2: memref<2xf32, #tpu.memory_space<smem>>, %arg3: memref<768xf32, #tpu.memory_space<smem>>, %arg4: memref<1x3x128xf32, #tpu.memory_space<vmem>>, %arg5: memref<1x1x128xi32, #tpu.memory_space<vmem>>, %arg6: memref<1x128xf32, #tpu.memory_space<vmem>>, %arg7: memref<1x128xi32, #tpu.memory_space<vmem>>, %arg8: memref<128xi32, #tpu.memory_space<smem>>) attributes {dimension_semantics = [#tpu.dimension_semantics<parallel>], iteration_bounds = array<i64: 2>, scalar_prefetch = 0 : i64, scratch_operands = 3 : i64, tpu.core_type = #tpu.core_type<tc>, window_params = [{transform_indices = @transform_0, window_bounds = array<i64: 2>}, {transform_indices = @transform_1, window_bounds = array<i64: 2>}, {transform_indices = @transform_2, window_bounds = array<i64: 768>}, {transform_indices = @transform_3, window_bounds = array<i64: 1, 3, 128>}, {transform_indices = @transform_4, window_bounds = array<i64: 1, 1, 128>}]} {
    %0 = tpu.iota {dimensions = array<i32: 1>} : vector<1x128xi32>
    %c8_i32 = arith.constant 8 : i32
    %1 = vector.broadcast %c8_i32 : i32 to vector<1x128xi32>
    %2 = arith.cmpi slt, %0, %1 : vector<1x128xi32>
    %c0_i32 = arith.constant 0 : i32
    %c1_i32 = arith.constant 1 : i32
    %3 = arith.muli %arg0, %c1_i32 : i32
    %4 = arith.addi %3, %c0_i32 : i32
    %5 = arith.index_cast %4 : i32 to index
    %6 = memref.load %arg1[%5] : memref<2xi32, #tpu.memory_space<smem>>
    %7 = arith.index_cast %4 : i32 to index
    %8 = memref.load %arg2[%7] : memref<2xf32, #tpu.memory_space<smem>>
    %c384_i32 = arith.constant 384 : i32
    %9 = arith.muli %4, %c384_i32 : i32
    %10 = arith.index_cast %c0_i32 : i32 to index
    %c0 = arith.constant 0 : index
    %c0_0 = arith.constant 0 : index
    %11 = vector.load %arg4[%10, %c0, %c0_0] : memref<1x3x128xf32, #tpu.memory_space<vmem>>, vector<1x3x128xf32>
    %12 = vector.shape_cast %11 : vector<1x3x128xf32> to vector<3x128xf32>
    %13 = vector.extract_strided_slice %12 {offsets = [0, 0], sizes = [1, 128], strides = [1, 1]} : vector<3x128xf32> to vector<1x128xf32>
    %14 = vector.extract_strided_slice %12 {offsets = [1, 0], sizes = [1, 128], strides = [1, 1]} : vector<3x128xf32> to vector<1x128xf32>
    %15 = vector.extract_strided_slice %12 {offsets = [2, 0], sizes = [1, 128], strides = [1, 1]} : vector<3x128xf32> to vector<1x128xf32>
    %c0_i32_1 = arith.constant 0 : i32
    %16 = arith.addi %9, %c0_i32_1 : i32
    %17 = arith.index_cast %16 : i32 to index
    %18 = memref.load %arg3[%17] : memref<768xf32, #tpu.memory_space<smem>>
    %c128_i32 = arith.constant 128 : i32
    %19 = arith.addi %9, %c128_i32 : i32
    %20 = arith.index_cast %19 : i32 to index
    %21 = memref.load %arg3[%20] : memref<768xf32, #tpu.memory_space<smem>>
    %c256_i32 = arith.constant 256 : i32
    %22 = arith.addi %9, %c256_i32 : i32
    %23 = arith.index_cast %22 : i32 to index
    %24 = memref.load %arg3[%23] : memref<768xf32, #tpu.memory_space<smem>>
    %25 = vector.broadcast %18 : f32 to vector<1x128xf32>
    %26 = arith.mulf %13, %25 : vector<1x128xf32>
    %27 = vector.broadcast %21 : f32 to vector<1x128xf32>
    %28 = arith.mulf %14, %27 : vector<1x128xf32>
    %29 = arith.addf %26, %28 : vector<1x128xf32>
    %30 = vector.broadcast %24 : f32 to vector<1x128xf32>
    %31 = arith.mulf %15, %30 : vector<1x128xf32>
    %32 = arith.addf %29, %31 : vector<1x128xf32>
    %33 = math.absf %32 : vector<1x128xf32>
    %cst = arith.constant 2.000000e+00 : f32
    %34 = vector.broadcast %cst : f32 to vector<1x128xf32>
    %35 = arith.select %2, %33, %34 : vector<1x128xi1>, vector<1x128xf32>
    %c0_2 = arith.constant 0 : index
    %c0_3 = arith.constant 0 : index
    %36 = vector.load %arg6[%c0_2, %c0_3] : memref<1x128xf32, #tpu.memory_space<vmem>>, vector<1x128xf32>
    tpu.vector_store %arg6[%c0_2, %c0_3], %35 {strides = array<i32>} : memref<1x128xf32, #tpu.memory_space<vmem>>, vector<1x128xf32>,
    %c0_i32_4 = arith.constant 0 : i32
    %c0_5 = arith.constant 0 : index
    %37 = memref.load %arg8[%c0_5] : memref<128xi32, #tpu.memory_space<smem>>
    memref.store %c0_i32_4, %arg8[%c0_5] : memref<128xi32, #tpu.memory_space<smem>>
    %38 = vector.broadcast %8 : f32 to vector<1x128xf32>
    %39 = arith.cmpf ole, %35, %38 : vector<1x128xf32>
    %c0_i32_6 = arith.constant 0 : i32
    %40 = vector.broadcast %c0_i32_6 : i32 to vector<1x128xi32>
    %41 = arith.cmpi sgt, %0, %40 : vector<1x128xi32>
    %42 = arith.andi %39, %41 : vector<1x128xi1>
    %c128_i32_7 = arith.constant 128 : i32
    %43 = vector.broadcast %c128_i32_7 : i32 to vector<1x128xi32>
    %44 = arith.select %42, %0, %43 : vector<1x128xi1>, vector<1x128xi32>
    %45 = vector.shape_cast %44 : vector<1x128xi32> to vector<1x1x128xi32>
    %cst_8 = arith.constant dense<2147483647> : vector<1xi32>
    %46 = vector.multi_reduction <minsi>, %45, %cst_8 [1, 2] : vector<1x1x128xi32> to vector<1xi32>
    %47 = vector.shape_cast %46 : vector<1xi32> to vector<1x1x1xi32>
    %48 = vector.extract %47[0, 0, 0] : i32 from vector<1x1x1xi32>
    %c1_i32_9 = arith.constant 1 : i32
    %49:2 = scf.while (%arg9 = %c1_i32_9, %arg10 = %48) : (i32, i32) -> (i32, i32) {
      %59 = arith.cmpi slt, %arg9, %6 : i32
      %c128_i32_21 = arith.constant 128 : i32
      %60 = arith.cmpi slt, %arg10, %c128_i32_21 : i32
      %61 = arith.andi %59, %60 : i1
      scf.condition(%61) %arg9, %arg10 : i32, i32
    } do {
    ^bb0(%arg9: i32, %arg10: i32):
      %59 = arith.index_cast %arg9 : i32 to index
      %60 = memref.load %arg8[%59] : memref<128xi32, #tpu.memory_space<smem>>
      memref.store %arg10, %arg8[%59] : memref<128xi32, #tpu.memory_space<smem>>
      %61 = arith.addi %9, %arg10 : i32
      %62 = arith.index_cast %61 : i32 to index
      %63 = memref.load %arg3[%62] : memref<768xf32, #tpu.memory_space<smem>>
      %c128_i32_21 = arith.constant 128 : i32
      %64 = arith.addi %9, %c128_i32_21 : i32
      %65 = arith.addi %64, %arg10 : i32
      %66 = arith.index_cast %65 : i32 to index
      %67 = memref.load %arg3[%66] : memref<768xf32, #tpu.memory_space<smem>>
      %c256_i32_22 = arith.constant 256 : i32
      %68 = arith.addi %9, %c256_i32_22 : i32
      %69 = arith.addi %68, %arg10 : i32
      %70 = arith.index_cast %69 : i32 to index
      %71 = memref.load %arg3[%70] : memref<768xf32, #tpu.memory_space<smem>>
      %72 = vector.broadcast %63 : f32 to vector<1x128xf32>
      %73 = arith.mulf %13, %72 : vector<1x128xf32>
      %74 = vector.broadcast %67 : f32 to vector<1x128xf32>
      %75 = arith.mulf %14, %74 : vector<1x128xf32>
      %76 = arith.addf %73, %75 : vector<1x128xf32>
      %77 = vector.broadcast %71 : f32 to vector<1x128xf32>
      %78 = arith.mulf %15, %77 : vector<1x128xf32>
      %79 = arith.addf %76, %78 : vector<1x128xf32>
      %80 = math.absf %79 : vector<1x128xf32>
      %c0_23 = arith.constant 0 : index
      %c0_24 = arith.constant 0 : index
      %81 = vector.load %arg6[%c0_23, %c0_24] : memref<1x128xf32, #tpu.memory_space<vmem>>, vector<1x128xf32>
      %82 = arith.maximumf %81, %80 : vector<1x128xf32>
      %c0_25 = arith.constant 0 : index
      %c0_26 = arith.constant 0 : index
      %83 = vector.load %arg6[%c0_25, %c0_26] : memref<1x128xf32, #tpu.memory_space<vmem>>, vector<1x128xf32>
      tpu.vector_store %arg6[%c0_25, %c0_26], %82 {strides = array<i32>} : memref<1x128xf32, #tpu.memory_space<vmem>>, vector<1x128xf32>,
      %84 = vector.broadcast %8 : f32 to vector<1x128xf32>
      %85 = arith.cmpf ole, %82, %84 : vector<1x128xf32>
      %86 = vector.broadcast %arg10 : i32 to vector<1x128xi32>
      %87 = arith.cmpi sgt, %0, %86 : vector<1x128xi32>
      %88 = arith.andi %85, %87 : vector<1x128xi1>
      %c128_i32_27 = arith.constant 128 : i32
      %89 = vector.broadcast %c128_i32_27 : i32 to vector<1x128xi32>
      %90 = arith.select %88, %0, %89 : vector<1x128xi1>, vector<1x128xi32>
      %91 = vector.shape_cast %90 : vector<1x128xi32> to vector<1x1x128xi32>
      %cst_28 = arith.constant dense<2147483647> : vector<1xi32>
      %92 = vector.multi_reduction <minsi>, %91, %cst_28 [1, 2] : vector<1x1x128xi32> to vector<1xi32>
      %93 = vector.shape_cast %92 : vector<1xi32> to vector<1x1x1xi32>
      %94 = vector.extract %93[0, 0, 0] : i32 from vector<1x1x1xi32>
      %c1_i32_29 = arith.constant 1 : i32
      %95 = arith.addi %arg9, %c1_i32_29 : i32
      scf.yield %95, %94 : i32, i32
    }
    %c0_i32_10 = arith.constant 0 : i32
    %50 = vector.broadcast %c0_i32_10 : i32 to vector<1x128xi32>
    %c0_11 = arith.constant 0 : index
    %c0_12 = arith.constant 0 : index
    %51 = vector.load %arg7[%c0_11, %c0_12] : memref<1x128xi32, #tpu.memory_space<vmem>>, vector<1x128xi32>
    tpu.vector_store %arg7[%c0_11, %c0_12], %50 {strides = array<i32>} : memref<1x128xi32, #tpu.memory_space<vmem>>, vector<1x128xi32>,
    %c0_i32_13 = arith.constant 0 : i32
    %c0_i32_14 = arith.constant 0 : i32
    %52 = arith.subi %49#0, %c0_i32_14 : i32
    %53 = arith.addi %c0_i32_14, %52 : i32
    %c1_i32_15 = arith.constant 1 : i32
    scf.for %arg9 = %c0_i32_14 to %53 step %c1_i32_15  : i32 {
      %59 = arith.index_cast %arg9 : i32 to index
      %60 = memref.load %arg8[%59] : memref<128xi32, #tpu.memory_space<smem>>
      %61 = vector.broadcast %60 : i32 to vector<1x128xi32>
      %62 = arith.cmpi eq, %0, %61 : vector<1x128xi32>
      %c0_21 = arith.constant 0 : index
      %c0_22 = arith.constant 0 : index
      %63 = vector.load %arg7[%c0_21, %c0_22] : memref<1x128xi32, #tpu.memory_space<vmem>>, vector<1x128xi32>
      %c1_i32_23 = arith.constant 1 : i32
      %64 = vector.broadcast %c1_i32_23 : i32 to vector<1x128xi32>
      %65 = arith.select %62, %64, %63 : vector<1x128xi1>, vector<1x128xi32>
      %c0_24 = arith.constant 0 : index
      %c0_25 = arith.constant 0 : index
      %66 = vector.load %arg7[%c0_24, %c0_25] : memref<1x128xi32, #tpu.memory_space<vmem>>, vector<1x128xi32>
      tpu.vector_store %arg7[%c0_24, %c0_25], %65 {strides = array<i32>} : memref<1x128xi32, #tpu.memory_space<vmem>>, vector<1x128xi32>,
    }
    %c0_16 = arith.constant 0 : index
    %c0_17 = arith.constant 0 : index
    %54 = vector.load %arg7[%c0_16, %c0_17] : memref<1x128xi32, #tpu.memory_space<vmem>>, vector<1x128xi32>
    %c0_18 = arith.constant 0 : index
    %55 = arith.index_cast %c0_i32 : i32 to index
    %c0_19 = arith.constant 0 : index
    %56 = vector.load %arg5[%c0_18, %55, %c0_19] : memref<1x1x128xi32, #tpu.memory_space<vmem>>, vector<1x1x128xi32>
    %57 = vector.shape_cast %56 : vector<1x1x128xi32> to vector<1x128xi32>
    %58 = vector.shape_cast %54 : vector<1x128xi32> to vector<1x1x128xi32>
    tpu.vector_store %arg5[%c0_18, %55, %c0_19], %58 {strides = array<i32>} : memref<1x1x128xi32, #tpu.memory_space<vmem>>, vector<1x1x128xi32>,
    %c1_i32_20 = arith.constant 1 : i32
    return
  }
  func.func @transform_0(%arg0: i32) -> i32 {
    %c0_i32 = arith.constant 0 : i32
    %c0_i32_0 = arith.constant 0 : i32
    return %c0_i32 : i32
  }
  func.func @transform_1(%arg0: i32) -> i32 {
    %c0_i32 = arith.constant 0 : i32
    %c0_i32_0 = arith.constant 0 : i32
    return %c0_i32 : i32
  }
  func.func @transform_2(%arg0: i32) -> i32 {
    %c0_i32 = arith.constant 0 : i32
    %c0_i32_0 = arith.constant 0 : i32
    return %c0_i32 : i32
  }
  func.func @transform_3(%arg0: i32) -> (i32, i32, i32) {
    %c0_i32 = arith.constant 0 : i32
    %c0_i32_0 = arith.constant 0 : i32
    %c0_i32_1 = arith.constant 0 : i32
    return %arg0, %c0_i32, %c0_i32_0 : i32, i32, i32
  }
  func.func @transform_4(%arg0: i32) -> (i32, i32, i32) {
    %c0_i32 = arith.constant 0 : i32
    %c0_i32_0 = arith.constant 0 : i32
    %c0_i32_1 = arith.constant 0 : i32
    return %arg0, %c0_i32, %c0_i32_0 : i32, i32, i32
  }
}

</mosaic_0001>

<llo_original>
// kernel: neg.0
$region0: #{neg.0}
  #allocation2 [shape = 's32[1]{0}', space=sflag, size = 0x4, scoped, tag = 'scoped memory for neg.0']
  %s0 = inlined_call_operand.hbm [shape: f32[2,8,1], index: 0, kind: input, shape index: {}]
  %s1 = inlined_call_operand.vmem [shape: f32[2,8,1], index: 1, kind: output, shape index: {}]
  $region1: #{neg.0} parent=0
    #allocation0 [shape = 'u8[1024]{0}', space=vmem, size = 0x400, scoped, tag = 'operand span for operand 0']
    #allocation1 [shape = 's32[1]{0}', space=sflag, size = 0x4, scoped, tag = 'scoped memory for neg.0']
    %2 = vsyncpa [#allocation1], 0
    %s4 = ssub.s32 32, 32
    %5 = vsyncadd [#allocation1], %s4
    %s6 = sshll.u32 [#allocation0], 4
    %s7 = int_to_ptr.vmem [resolvable:$true] %s6
    %12 = dma.hbm_to_vmem [thread:$0]  %s0, 32, %s7, [#allocation1], 16, 16, 1
    %13 = dma.done [#allocation1], 32
    %v14 = vld [vmem:[#allocation0] sm:$0x1]
    %15 = xla_tuple %v14
    %16 = xla_tuple %15
    %v17 = vxor.u32 %v14, 2147483648
    %18 = xla_tuple %v17
    %19 = vst [vmem:[%s1] sm:$0x1] %v17
    %s20 = scalar_lea.vmem [#allocation0], 1
    %v21 = vld [vmem:[%s20] sm:$0x1]
    %22 = xla_tuple %v21
    %23 = xla_tuple %22
    %v24 = vxor.u32 %v21, 2147483648
    %25 = xla_tuple %v24
    %s26 = scalar_lea.vmem %s1, 1
    %27 = vst [vmem:[%s26] sm:$0x1] %v24
    %28 = vsyncpa [#allocation1], 1

// kernel: _device_select.1
$region0: #{_device_select.1}
  #allocation0 [shape = 'u32[]', space=smem, size = 0x4, offset = 0x4, fixed_abs, tag = 'smem constant byte address 0x4 - core index']
  #allocation1 [shape = 'u32[144,128]{1,0:T(1,128)}', space=vmem, size = 0x12000, scoped, tag = 'internal scratch']
  #allocation2 [shape = 'f32[1,128]{1,0:T(1,128)}', space=vmem, size = 0x200, scoped, tag = 'scratch operand']
  #allocation3 [shape = 's32[1,128]{1,0:T(1,128)}', space=vmem, size = 0x200, scoped, tag = 'scratch operand']
  #allocation4 [shape = 's32[128]{0:T(128)}', space=smem, size = 0x200, scoped, tag = 'scratch operand']
  %s0 = inlined_call_operand.vmem [shape: s32[2], index: 0, kind: input, shape index: {}]
  %s1 = inlined_call_operand.vmem [shape: f32[2], index: 1, kind: input, shape index: {}]
  %s2 = inlined_call_operand.vmem [shape: f32[768], index: 2, kind: input, shape index: {}]
  %s3 = inlined_call_operand.vmem [shape: f32[2,3,128], index: 3, kind: input, shape index: {}]
  %s4 = inlined_call_operand.hbm [shape: s32[2,1,128], index: 4, kind: output, shape index: {}]
  %s5 = sld [smem:[#allocation0]]
  $region75: #{_device_select.1} parent=0
    _
  %s7 = ssub.s32 1, %s5
  %s8 = scalar_select 0, %s7, %s5
  $region1: #{_device_select.1} parent=0
    #allocation5 [shape = 'u8[512]{0}', space=smem, size = 0x200, scoped, tag = 'input window, operand 0, single buffered']
    #allocation6 [shape = 's32[2]{0}', space=sflag, size = 0x8, scoped, tag = 'scoped memory for _device_select.1']
    #allocation7 [shape = 's32[2]{0}', space=sflag, size = 0x8, scoped, tag = 'scoped memory for _device_select.1']
    #allocation8 [shape = 'u8[512]{0}', space=smem, size = 0x200, scoped, tag = 'input window, operand 1, single buffered']
    #allocation9 [shape = 's32[1]{0}', space=sflag, size = 0x4, scoped, tag = 'scoped memory for _device_select.1']
    #allocation10 [shape = 'u8[3072]{0}', space=smem, size = 0xc00, scoped, tag = 'input window, operand 2, single buffered']
    #allocation11 [shape = 'u8[1024]{0}', space=vmem, size = 0x400, scoped, tag = 'output window, operand 0']
    %9 = vsyncpa [#allocation7], 0
    %10 = vsyncpa [#allocation9], 0
    %11 = vsyncpa [#allocation6], 0
    %s12 = scalar_lea.sflag [#allocation6], 1
    %13 = vsyncpa %s12, 0
    loop: start=0, step=1, limit=4
    $region2: #{_device_select.1} parent=1 // loop_pre_header
      _
    $region3: #{_device_select.1} parent=1 // loop_header
      %s15 = sphi 0, %s19
      %p16 = scmp.ge.s32.totalorder %s15, 4
      %s23 = sphi 0, %s23
      %s25 = sphi 0, %s23
      %s26 = sphi 0, %s25
      %s40 = sphi 0, %s26
      %s44 = sphi 0, %s44
      %s46 = sphi 0, %s44
      %s47 = sphi 0, %s46
      %s61 = sphi 0, %s47
      %s65 = sphi 0, %s65
      %s67 = sphi 0, %s65
      %s68 = sphi 0, %s67
      %s82 = sphi 0, %s68
      %s88 = sphi 0, %s90
      %s91 = sphi 0, %s88
      %s92 = sphi 0, %s91
      %s108 = sphi 0, %s92
      %s114 = sphi 0, %s116
      %s117 = sphi 0, %s114
      %s118 = sphi 0, %s117
      %s134 = sphi 0, %s118
    $region4: #{_device_select.1} parent=1 // loop_header_branch
      %18 = sbr.rel (%p16) target = $region8
    $region5: #{_device_select.1} parent=1 // loop_body
      %s20 = ssub.s32 %s15, 1
      %s21 = ssub.s32 %s15, 2
      %s22 = sadd.s32 %s15, 1
      %s24 = sadd.s32 %s23, 1
      %p27 = scmp.eq.s32.totalorder %s15, 1
      %p28 = scmp.ne.s32.totalorder %s23, %s25
      %p29 = scmp.eq.s32.totalorder %s15, 0
      %p30 = por %p28, %p29
      %p31 = scmp.ne.s32.totalorder %s23, %s25
      %p32 = scmp.eq.s32.totalorder %s20, 1
      %p33 = por %p31, %p32
      %p34 = scmp.ne.s32.totalorder %s25, %s26
      %p35 = scmp.eq.s32.totalorder %s20, 0
      %p36 = por %p34, %p35
      %p37 = scmp.ne.s32.totalorder %s25, %s26
      %p38 = scmp.eq.s32.totalorder %s21, 1
      %p39 = por %p37, %p38
      %p41 = scmp.ne.s32.totalorder %s26, %s40
      %p42 = scmp.eq.s32.totalorder %s21, 0
      %p43 = por %p41, %p42
      %s45 = sadd.s32 %s44, 1
      %p48 = scmp.eq.s32.totalorder %s15, 1
      %p49 = scmp.ne.s32.totalorder %s44, %s46
      %p50 = scmp.eq.s32.totalorder %s15, 0
      %p51 = por %p49, %p50
      %p52 = scmp.ne.s32.totalorder %s44, %s46
      %p53 = scmp.eq.s32.totalorder %s20, 1
      %p54 = por %p52, %p53
      %p55 = scmp.ne.s32.totalorder %s46, %s47
      %p56 = scmp.eq.s32.totalorder %s20, 0
      %p57 = por %p55, %p56
      %p58 = scmp.ne.s32.totalorder %s46, %s47
      %p59 = scmp.eq.s32.totalorder %s21, 1
      %p60 = por %p58, %p59
      %p62 = scmp.ne.s32.totalorder %s47, %s61
      %p63 = scmp.eq.s32.totalorder %s21, 0
      %p64 = por %p62, %p63
      %s66 = sadd.s32 %s65, 1
      %p69 = scmp.eq.s32.totalorder %s15, 1
      %p70 = scmp.ne.s32.totalorder %s65, %s67
      %p71 = scmp.eq.s32.totalorder %s15, 0
      %p72 = por %p70, %p71
      %p73 = scmp.ne.s32.totalorder %s65, %s67
      %p74 = scmp.eq.s32.totalorder %s20, 1
      %p75 = por %p73, %p74
      %p76 = scmp.ne.s32.totalorder %s67, %s68
      %p77 = scmp.eq.s32.totalorder %s20, 0
      %p78 = por %p76, %p77
      %p79 = scmp.ne.s32.totalorder %s67, %s68
      %p80 = scmp.eq.s32.totalorder %s21, 1
      %p81 = por %p79, %p80
      %p83 = scmp.ne.s32.totalorder %s68, %s82
      %p84 = scmp.eq.s32.totalorder %s21, 0
      %p85 = por %p83, %p84
      %s86 = ssub.s32 %s15, %s22
      %p87 = scmp.eq.s32.totalorder %s86, 0
      %s89 = sadd.s32 %s88, 1
      %s90 = scalar_select %p87, %s88, %s89
      %p93 = pneg %p87
      %p94 = scmp.eq.s32.totalorder %s15, 1
      %p95 = por %p93, %p94
      %p96 = scmp.ne.s32.totalorder %s88, %s91
      %p97 = scmp.eq.s32.totalorder %s15, 0
      %p98 = por %p96, %p97
      %p99 = scmp.ne.s32.totalorder %s88, %s91
      %p100 = scmp.eq.s32.totalorder %s20, 1
      %p101 = por %p99, %p100
      %p102 = scmp.ne.s32.totalorder %s91, %s92
      %p103 = scmp.eq.s32.totalorder %s20, 0
      %p104 = por %p102, %p103
      %p105 = scmp.ne.s32.totalorder %s91, %s92
      %p106 = scmp.eq.s32.totalorder %s21, 1
      %p107 = por %p105, %p106
      %p109 = scmp.ne.s32.totalorder %s92, %s108
      %p110 = scmp.eq.s32.totalorder %s21, 0
      %p111 = por %p109, %p110
      %s112 = ssub.s32 %s15, %s22
      %p113 = scmp.eq.s32.totalorder %s112, 0
      %s115 = sadd.s32 %s114, 1
      %s116 = scalar_select %p113, %s114, %s115
      %p119 = pneg %p113
      %p120 = scmp.eq.s32.totalorder %s15, 1
      %p121 = por %p119, %p120
      %p122 = scmp.ne.s32.totalorder %s114, %s117
      %p123 = scmp.eq.s32.totalorder %s15, 0
      %p124 = por %p122, %p123
      %p125 = scmp.ne.s32.totalorder %s114, %s117
      %p126 = scmp.eq.s32.totalorder %s20, 1
      %p127 = por %p125, %p126
      %p128 = scmp.ne.s32.totalorder %s117, %s118
      %p129 = scmp.eq.s32.totalorder %s20, 0
      %p130 = por %p128, %p129
      %p131 = scmp.ne.s32.totalorder %s117, %s118
      %p132 = scmp.eq.s32.totalorder %s21, 1
      %p133 = por %p131, %p132
      %p135 = scmp.ne.s32.totalorder %s118, %s134
      %p136 = scmp.eq.s32.totalorder %s21, 0
      %p137 = por %p135, %p136
      %p138 = scmp.le.s32.totalorder 1, %s15
      %p139 = scmp.lt.s32.totalorder %s15, 3
      %p140 = pnand %p138, %p139
      %p141 = pneg %p140
      // Predicated region
      $region9: #{_device_select.1} parent=5 // pred_check
        _
      $region10: #{_device_select.1} parent=5 // pred_check_branch
        %143 = sbr.rel (%p140) target = $region12
      $region11: #{_device_select.1} parent=5 // pred_region
        %s144 = ssub.s32 %s15, 1
        // Predicated region
        $region13: #{_device_select.1} parent=11 // pred_check
          %p145 = pneg %p36
        $region14: #{_device_select.1} parent=11 // pred_check_branch
          %147 = sbr.rel (%p145) target = $region16
        $region15: #{_device_select.1} parent=11 // pred_region
          %s149 = ssub.s32 16, 16
          %150 = vsyncadd [#allocation7], %s149
          %s152 = sshll.u32 %s0, 4
          %s153 = int_to_ptr.vmem [resolvable:$true] %s152
          %155 = dma.vmem_to_smem %s153, 16, [#allocation5], [#allocation7]
        $region16: #{_device_select.1} parent=11 // pred_fallthru
          _
        // Predicated region
        $region17: #{_device_select.1} parent=11 // pred_check
          %p156 = pneg %p57
        $region18: #{_device_select.1} parent=11 // pred_check_branch
          %158 = sbr.rel (%p156) target = $region20
        $region19: #{_device_select.1} parent=11 // pred_region
          %s160 = ssub.s32 16, 16
          %161 = vsyncadd [#allocation9], %s160
          %s163 = sshll.u32 %s1, 4
          %s164 = int_to_ptr.vmem [resolvable:$true] %s163
          %166 = dma.vmem_to_smem %s164, 16, [#allocation8], [#allocation9]
        $region20: #{_device_select.1} parent=11 // pred_fallthru
          _
        // Predicated region
        $region21: #{_device_select.1} parent=11 // pred_check
          %p167 = pneg %p78
        $region22: #{_device_select.1} parent=11 // pred_check_branch
          %169 = sbr.rel (%p167) target = $region24
        $region23: #{_device_select.1} parent=11 // pred_region
          %s171 = ssub.s32 96, 96
          %172 = vsyncadd [#allocation9], %s171
          %s174 = sshll.u32 %s2, 4
          %s175 = int_to_ptr.vmem [resolvable:$true] %s174
          %177 = dma.vmem_to_smem %s175, 96, [#allocation10], [#allocation9]
        $region24: #{_device_select.1} parent=11 // pred_fallthru
          _
      $region12: #{_device_select.1} parent=5 // pred_fallthru
        _
      %p178 = scmp.lt.s32.totalorder %s15, 2
      // Predicated region
      $region25: #{_device_select.1} parent=5 // pred_check
        %p179 = pneg %p178
      $region26: #{_device_select.1} parent=5 // pred_check_branch
        %181 = sbr.rel (%p179) target = $region28
      $region27: #{_device_select.1} parent=5 // pred_region
        // Predicated region
        $region29: #{_device_select.1} parent=27 // pred_check
          %p182 = pneg %p98
        $region30: #{_device_select.1} parent=27 // pred_check_branch
          %184 = sbr.rel (%p182) target = $region32
        $region31: #{_device_select.1} parent=27 // pred_region
          %p185 = scmp.lt.s32.totalorder %s15, 1
          %s186 = scalar_select %p185, %s15, 1
          %s187 = smul.addr %s186, 4
          %s188 = scalar_lea.vmem %s3, %s187
        $region32: #{_device_select.1} parent=27 // pred_fallthru
          _
      $region28: #{_device_select.1} parent=5 // pred_fallthru
        _
      %p189 = scmp.le.s32.totalorder 1, %s15
      %p190 = scmp.lt.s32.totalorder %s15, 3
      %p191 = pnand %p189, %p190
      %p192 = pneg %p191
      // Predicated region
      $region33: #{_device_select.1} parent=5 // pred_check
        _
      $region34: #{_device_select.1} parent=5 // pred_check_branch
        %194 = sbr.rel (%p191) target = $region36
      $region35: #{_device_select.1} parent=5 // pred_region
        %s195 = ssub.s32 %s15, 1
        // Predicated region
        $region37: #{_device_select.1} parent=35 // pred_check
          %p196 = pneg %p36
        $region38: #{_device_select.1} parent=35 // pred_check_branch
          %198 = sbr.rel (%p196) target = $region40
        $region39: #{_device_select.1} parent=35 // pred_region
          %199 = dma.done [#allocation7], 16
        $region40: #{_device_select.1} parent=35 // pred_fallthru
          _
        // Predicated region
        $region41: #{_device_select.1} parent=35 // pred_check
          %p200 = pneg %p57
        $region42: #{_device_select.1} parent=35 // pred_check_branch
          %202 = sbr.rel (%p200) target = $region44
        $region43: #{_device_select.1} parent=35 // pred_region
          %203 = dma.done [#allocation9], 16
        $region44: #{_device_select.1} parent=35 // pred_fallthru
          _
        // Predicated region
        $region45: #{_device_select.1} parent=35 // pred_check
          %p204 = pneg %p78
        $region46: #{_device_select.1} parent=35 // pred_check_branch
          %206 = sbr.rel (%p204) target = $region48
        $region47: #{_device_select.1} parent=35 // pred_region
          %207 = dma.done [#allocation9], 96
        $region48: #{_device_select.1} parent=35 // pred_fallthru
          _
        %208 = sfence
        %p209 = pneg %p36
        %p210 = pneg %p33
        %p211 = pneg %p57
        %p212 = pneg %p54
        %p213 = pneg %p78
        %p214 = pneg %p75
        %p215 = scmp.lt.s32.totalorder %s20, 1
        %s216 = scalar_select %p215, %s20, 1
        %s217 = smul.addr %s216, 4
        %s218 = scalar_lea.vmem %s3, %s217
        %p219 = pneg %p104
        %p220 = pneg %p101
        %p221 = pneg %p130
        %p222 = pneg %p127
        %s223 = sand.u32 %s117, 1
        %s224 = scalar_lea.sflag [#allocation6], %s223
        %s225 = sand.u32 %s117, 1
        %s226 = scalar_lea.vmem [#allocation11], %s225
        %p227 = scmp.lt.s32.totalorder %s20, 1
        %s228 = scalar_select %p227, %s20, 1
        %s229 = smul.addr %s228, 4
        %s230 = scalar_lea.vmem %s3, %s229
        %v231 = vlaneseq
        %v232 = vand.u32 %v231, 127
        %vm233 = vcmp.lt.s32.totalorder %v232, 8
        %s234 = sld [smem:[#allocation5 + %s20]]
        %s235 = sld [smem:[#allocation8 + %s20]]
        %s236 = smul.u32 %s20, 384
        %v237 = vld [vmem:[%s230] sm:$0x7]
        %s238 = sld [smem:[#allocation10 + %s236]]
        %s239 = sadd.s32 %s236, 128
        %s240 = sld [smem:[#allocation10 + %s239]]
        %s241 = sadd.s32 %s236, 256
        %s242 = sld [smem:[#allocation10 + %s241]]
        %v243 = vstv %s238
        %v244 = vmul.f32 %v237, %v243
        %v245 = vstv %s240
        %v246 = vmul.f32 %v237, %v245
        %v248 = vrot.slane %v246, 1
        %v250 = vadd.f32 %v244, %v248
        %v251 = vstv %s242
        %v252 = vmul.f32 %v237, %v251
        %v254 = vrot.slane %v252, 2
        %v256 = vadd.f32 %v250, %v254
        %v257 = vand.u32 2147483647, %v256
        %v258 = vsel %vm233, %v257, 2.0
        %259 = vst [vmem:[#allocation2] sm:$0x1] %v258
        %s260 = scalar_lea.smem [#allocation4], 0
        %261 = sst [smem:[%s260]] 0
        %v262 = vstv %s235
        %vm263 = vcmp.le.f32.partialorder %v258, %v262
        %vm264 = vcmp.gt.s32.totalorder %v232, 0
        %vm265 = vmand %vm263, %vm264
        %v266 = vsel %vm265, %v232, 128
        %vm267 = vcmask 1040384
        %v268 = vsel %vm267, %v266, 2147483647
        %v269 = vand.u32 %v268, 65535
        %v270 = vshra.s32 %v268, 16
        %v271 = vcvt.s32.f32 %v269
        %v272 = vcvt.s32.f32 %v270
        %273 = vmin.xlane.f32.xlu0 %v272
        %v274 = vpop.xlane.xlu0 %273
        %vm275 = vcmp.eq.f32.partialorder %v272, %v274
        %v276 = vsel %vm275, %v271, inf
        %277 = vmin.xlane.f32.xlu0 %v276
        %v278 = vpop.xlane.xlu0 %277
        %v279 = vcvt.f32.s32 %v278
        %v280 = vcvt.f32.s32 %v274
        %v281 = vshll.u32 %v280, 16
        %v282 = vadd.s32 %v281, %v279
        %v283 = vrot.slane %v282, 4
        %vm284 = vcmp.lt.s32.totalorder %v282, %v283
        %v285 = vsel %vm284, %v282, %v283
        %v286 = vrot.slane %v285, 2
        %vm287 = vcmp.lt.s32.totalorder %v285, %v286
        %v288 = vsel %vm287, %v285, %v286
        %v289 = vrot.slane %v288, 1
        %vm290 = vcmp.lt.s32.totalorder %v288, %v289
        %v291 = vsel %vm290, %v288, %v289
        %s292 = vtos %v291
        // While loop
        $region49: #{_device_select.1} parent=35 // loop_pre_header
          _
        $region50: #{_device_select.1} parent=35 // loop_header
          %s294 = sphi 1, %s358
          %s295 = sphi %s292, %s357
          %p296 = scmp.lt.s32.totalorder %s294, %s234
          %p297 = scmp.lt.s32.totalorder %s295, 128
          %p298 = pnand %p296, %p297
          %p299 = pneg %p298
        $region51: #{_device_select.1} parent=35 // loop_header_branch
          %301 = sbr.rel (%p298) target = $region55
        $region52: #{_device_select.1} parent=35 // loop_body
          %s302 = scalar_lea.smem [#allocation4], %s294
          %303 = sst [smem:[%s302]] %s295
          %s304 = sadd.s32 %s236, %s295
          %s305 = sld [smem:[#allocation10 + %s304]]
          %s306 = sadd.s32 %s239, %s295
          %s307 = sld [smem:[#allocation10 + %s306]]
          %s308 = sadd.s32 %s241, %s295
          %s309 = sld [smem:[#allocation10 + %s308]]
          %v310 = vstv %s305
          %v311 = vmul.f32 %v237, %v310
          %v312 = vstv %s307
          %v313 = vmul.f32 %v237, %v312
          %v315 = vrot.slane %v313, 1
          %v317 = vadd.f32 %v311, %v315
          %v318 = vstv %s309
          %v319 = vmul.f32 %v237, %v318
          %v321 = vrot.slane %v319, 2
          %v323 = vadd.f32 %v317, %v321
          %v324 = vand.u32 2147483647, %v323
          %v325 = vld [vmem:[#allocation2] sm:$0x1]
          %v326 = vmax.f32 %v325, %v324
          %327 = vst [vmem:[#allocation2] sm:$0x1] %v326
          %vm328 = vcmp.le.f32.partialorder %v326, %v262
          %v329 = vstv %s295
          %vm330 = vcmp.gt.s32.totalorder %v232, %v329
          %vm331 = vmand %vm328, %vm330
          %v332 = vsel %vm331, %v232, 128
          %v333 = vsel %vm267, %v332, 2147483647
          %v334 = vand.u32 %v333, 65535
          %v335 = vshra.s32 %v333, 16
          %v336 = vcvt.s32.f32 %v334
          %v337 = vcvt.s32.f32 %v335
          %338 = vmin.xlane.f32.xlu0 %v337
          %v339 = vpop.xlane.xlu0 %338
          %vm340 = vcmp.eq.f32.partialorder %v337, %v339
          %v341 = vsel %vm340, %v336, inf
          %342 = vmin.xlane.f32.xlu0 %v341
          %v343 = vpop.xlane.xlu0 %342
          %v344 = vcvt.f32.s32 %v343
          %v345 = vcvt.f32.s32 %v339
          %v346 = vshll.u32 %v345, 16
          %v347 = vadd.s32 %v346, %v344
          %v348 = vrot.slane %v347, 4
          %vm349 = vcmp.lt.s32.totalorder %v347, %v348
          %v350 = vsel %vm349, %v347, %v348
          %v351 = vrot.slane %v350, 2
          %vm352 = vcmp.lt.s32.totalorder %v350, %v351
          %v353 = vsel %vm352, %v350, %v351
          %v354 = vrot.slane %v353, 1
          %vm355 = vcmp.lt.s32.totalorder %v353, %v354
          %v356 = vsel %vm355, %v353, %v354
          %s357 = vtos %v356
          %s358 = sadd.s32 %s294, 1
        $region53: #{_device_select.1} parent=35 // loop_footer
          _
        $region54: #{_device_select.1} parent=35 // loop_footer_branch
          %293 = sbr.rel target = $region50
        $region55: #{_device_select.1} parent=35 // loop_exit
          _
        %359 = vst [vmem:[#allocation3] sm:$0x1] 0
        // While loop
        $region56: #{_device_select.1} parent=35 // loop_pre_header
          _
        $region57: #{_device_select.1} parent=35 // loop_header
          %s361 = sphi 0, %s363
          %p362 = scmp.ge.s32.totalorder %s361, %s294
        $region58: #{_device_select.1} parent=35 // loop_header_branch
          %365 = sbr.rel (%p362) target = $region62
        $region59: #{_device_select.1} parent=35 // loop_body
          %s366 = sld [smem:[#allocation4 + %s361]]
          %v367 = vstv %s366
          %vm368 = vcmp.eq.s32.totalorder %v232, %v367
          %v369 = vld [vmem:[#allocation3] sm:$0x1]
          %v370 = vsel %vm368, 1, %v369
          %371 = vst [vmem:[#allocation3] sm:$0x1] %v370
        $region60: #{_device_select.1} parent=35 // loop_footer
          %s363 = sadd.s32 %s361, 1
        $region61: #{_device_select.1} parent=35 // loop_footer_branch
          %360 = sbr.rel target = $region57
        $region62: #{_device_select.1} parent=35 // loop_exit
          _
        %v372 = vld [vmem:[#allocation3] sm:$0x1]
        %373 = vst [vmem:[%s226] sm:$0x1] %v372
        %s374 = sand.u32 %s117, 1
        %s375 = scalar_lea.sflag [#allocation6], %s374
        %s376 = sand.u32 %s117, 1
        %s377 = scalar_lea.vmem [#allocation11], %s376
        // Predicated region
        $region63: #{_device_select.1} parent=35 // pred_check
          %p378 = pneg %p127
        $region64: #{_device_select.1} parent=35 // pred_check_branch
          %380 = sbr.rel (%p378) target = $region66
        $region65: #{_device_select.1} parent=35 // pred_region
          %s382 = ssub.s32 16, 16
          %383 = vsyncadd %s375, %s382
          %s384 = smul.addr %s20, 16
          %s385 = scalar_lea.hbm %s4, %s384
          %s387 = sshll.u32 %s377, 4
          %s388 = int_to_ptr.vmem [resolvable:$true] %s387
          %390 = dma.vmem_to_hbm [thread:$0]  %s388, 16, %s385, %s375
        $region66: #{_device_select.1} parent=35 // pred_fallthru
          _
      $region36: #{_device_select.1} parent=5 // pred_fallthru
        _
      %p391 = scmp.le.s32.totalorder 2, %s15
      // Predicated region
      $region67: #{_device_select.1} parent=5 // pred_check
        %p392 = pneg %p391
      $region68: #{_device_select.1} parent=5 // pred_check_branch
        %394 = sbr.rel (%p392) target = $region70
      $region69: #{_device_select.1} parent=5 // pred_region
        %s395 = ssub.s32 %s15, 2
        // Predicated region
        $region71: #{_device_select.1} parent=69 // pred_check
          %p396 = pneg %p133
        $region72: #{_device_select.1} parent=69 // pred_check_branch
          %398 = sbr.rel (%p396) target = $region74
        $region73: #{_device_select.1} parent=69 // pred_region
          %s399 = sand.u32 %s118, 1
          %s400 = scalar_lea.sflag [#allocation6], %s399
          %s401 = sand.u32 %s118, 1
          %s402 = scalar_lea.vmem [#allocation11], %s401
          %403 = dma.done %s400, 16
        $region74: #{_device_select.1} parent=69 // pred_fallthru
          _
      $region70: #{_device_select.1} parent=5 // pred_fallthru
        _
    $region6: #{_device_select.1} parent=1 // loop_footer
      %s19 = sadd.s32 1, %s15
    $region7: #{_device_select.1} parent=1 // loop_footer_branch
      %14 = sbr.rel target = $region3
    $region8: #{_device_select.1} parent=1 // loop_exit
      _
    %404 = vsyncpa [#allocation6], 1
    %s405 = scalar_lea.sflag [#allocation6], 1
    %406 = vsyncpa %s405, 1
    %407 = vsyncpa [#allocation7], 1
    %s408 = scalar_lea.sflag [#allocation7], 1
    %409 = vsyncpa %s408, 1
    %410 = vsyncpa [#allocation9], 1

</llo_original>
